<compile_context>
chip_gen: v6e
topology: v6e:2x2x1
jax: 0.10.0
libtpu: 0.0.40
codegen_flags: <defaults>
</compile_context>

<pallas_src>
import jax
import jax.numpy as jnp
from jax import lax
from jax.experimental import pallas as pl
from jax.experimental.pallas import tpu as pltpu

IN_FEATURES = 64
OUT_FEATURES = 64
PACK = 2                        # original rows packed per 128-lane row
K = PACK * IN_FEATURES          # 128 (contraction width)
N = PACK * OUT_FEATURES         # 128 (output lane width)

_MAX_ROW_TILE = 4096   # 4096 packed rows * 128 lanes * 4 B = 2 MiB per x/y block
_MIN_ROW_TILE = 512
_MIN_GRID = 4          # keep >= 4 grid steps so both v7x TCs get work
_PIPELINE_ROWS = 2048  # packed-row count above which the tiled path is used


def _linear_kernel(x_ref, w_ref, b_ref, o_ref):
    # Contract over the last dim of BOTH operands so the MXU consumes the
    # (OUT, IN)-oriented weight directly (no wrapper-side .T).
    acc = lax.dot_general(
        x_ref[...], w_ref[...],
        dimension_numbers=(((1,), (1,)), ((), ())),
        preferred_element_type=jnp.float32,
    )
    o_ref[...] = (acc + b_ref[...]).astype(o_ref.dtype)


def _cost(rows, k, n):
    elems = rows * k + n * k + n + rows * n
    return pl.CostEstimate(flops=2 * rows * k * n, transcendentals=0,
                           bytes_accessed=elems * 4)


def _pick_row_tile(rows):
    # Biggest sublane-aligned tile <= 2 MiB blocks that keeps grid >= _MIN_GRID.
    tile = min(_MAX_ROW_TILE, max(_MIN_ROW_TILE, rows // _MIN_GRID))
    return max(8, (tile // 8) * 8)


def linear_forward(x, weight, bias):
    """PyTorch nn.Linear(64, 64) forward: y = x @ weight.T + bias.

    x: (B, 64) float32, weight: (64, 64) = (OUT, IN), bias: (64,)
    """
    B = x.shape[0]

    # Lane-dense packing: (B, 64) row-major == (B//2, 128).  Pad one zero row
    # if B is odd so every batch size stays on the packed path.
    pad = B % PACK
    if pad:
        x = jnp.pad(x, ((0, PACK - pad), (0, 0)))
    rows = x.shape[0] // PACK
    xp = x.reshape(rows, K)

    # One-time 128x128 block-diagonal weight + 128-wide bias (layout plumbing,
    # negligible vs. x/y HBM traffic).
    zeros = jnp.zeros_like(weight)
    w_blk = jnp.block([[weight, zeros], [zeros, weight]])      # (N, K), (OUT, IN)
    b_blk = jnp.tile(bias, PACK).reshape(1, N)                 # (1, N)

    # TODO(synk): optional bf16 cast of x/w (f32 accumulate) would halve HBM
    # traffic but changes numerics vs. the f32 PyTorch module, so kept f32.

    if rows >= _PIPELINE_ROWS:
        # Large-batch path: tile over packed rows so HBM->VMEM DMA of x
        # pipelines with the matmul; weight + bias blocks stay VMEM-resident.
        tile = _pick_row_tile(rows)
        grid = (pl.cdiv(rows, tile),)   # ragged last block handled by Pallas
        out = pl.pallas_call(
            _linear_kernel,
            out_shape=jax.ShapeDtypeStruct((rows, N), x.dtype),
            grid=grid,
            in_specs=[
                # TODO(synk): sweep pipeline_mode=pl.Buffered(3) on this spec
                # if the x DMA is still exposed in traces.
                pl.BlockSpec((tile, K), lambda i: (i, 0)),
                pl.BlockSpec((N, K), lambda i: (0, 0)),
                pl.BlockSpec((1, N), lambda i: (0, 0)),
            ],
            out_specs=pl.BlockSpec((tile, N), lambda i: (i, 0)),
            compiler_params=pltpu.CompilerParams(
                dimension_semantics=("parallel",),  # shard over v7x's 2 TCs
            ),
            cost_estimate=_cost(rows, K, N),
        )(xp, w_blk, b_blk)
    else:
        # Small-batch path (the spec's B=2 case): no grid at all -- the tiny
        # working set lives whole in VMEM, avoiding pipeline bookkeeping.
        out = pl.pallas_call(
            _linear_kernel,
            out_shape=jax.ShapeDtypeStruct((rows, N), x.dtype),
            in_specs=[
                pl.BlockSpec(memory_space=pltpu.MemorySpace.VMEM),
                pl.BlockSpec(memory_space=pltpu.MemorySpace.VMEM),
                pl.BlockSpec(memory_space=pltpu.MemorySpace.VMEM),
            ],
            out_specs=pl.BlockSpec(memory_space=pltpu.MemorySpace.VMEM),
            cost_estimate=_cost(rows, K, N),
        )(xp, w_blk, b_blk)

    y = out.reshape(rows * PACK, OUT_FEATURES)
    return y[:B] if pad else y


if __name__ == "__main__":
    key = jax.random.PRNGKey(0)
    k_x, k_w, k_b = jax.random.split(key, 3)

    # Shapes from the PyTorch spec: x = torch.randn((2, 64)); nn.Linear(64, 64).
    x = jax.random.normal(k_x, (2, IN_FEATURES), dtype=jnp.float32)
    bound = 1.0 / (IN_FEATURES ** 0.5)
    weight = jax.random.uniform(
        k_w, (OUT_FEATURES, IN_FEATURES), dtype=jnp.float32,
        minval=-bound, maxval=bound)
    bias = jax.random.uniform(
        k_b, (OUT_FEATURES,), dtype=jnp.float32, minval=-bound, maxval=bound)

    y = linear_forward(x, weight, bias)
    y = jax.block_until_ready(y)

    # Correctness check against plain-JAX reference of the PyTorch semantics.
    y_ref = x @ weight.T + bias
    assert y.shape == (2, OUT_FEATURES)
    assert jnp.allclose(y, y_ref, atol=1e-5, rtol=1e-5)

    print("KERNEL_OK")
</pallas_src>

<mosaic_0001>
module attributes {stable_mosaic.version = 11 : i64} {
  func.func @_linear_kernel(%arg0: memref<1x128xf32, #tpu.memory_space<vmem>>, %arg1: memref<128x128xf32, #tpu.memory_space<vmem>>, %arg2: memref<1x128xf32, #tpu.memory_space<vmem>>, %arg3: memref<1x128xf32, #tpu.memory_space<vmem>>) attributes {dimension_semantics = [], scalar_prefetch = 0 : i64, scratch_operands = 0 : i64, tpu.core_type = #tpu.core_type<tc>} {
    %c0 = arith.constant 0 : index
    %c0_0 = arith.constant 0 : index
    %0 = vector.load %arg0[%c0, %c0_0] : memref<1x128xf32, #tpu.memory_space<vmem>>, vector<1x128xf32>
    %c0_1 = arith.constant 0 : index
    %c0_2 = arith.constant 0 : index
    %1 = vector.load %arg1[%c0_1, %c0_2] : memref<128x128xf32, #tpu.memory_space<vmem>>, vector<128x128xf32>
    %cst = arith.constant dense<0.000000e+00> : vector<1x128xf32>
    %2 = tpu.matmul %0, %1, %cst {dimension_numbers = #tpu.dot_dimension_numbers<[1], [1], [0], [0], [0, 0, 1, 0], [], []>} : vector<1x128xf32>, vector<128x128xf32>, vector<1x128xf32> -> vector<1x128xf32>
    %c0_3 = arith.constant 0 : index
    %c0_4 = arith.constant 0 : index
    %3 = vector.load %arg2[%c0_3, %c0_4] : memref<1x128xf32, #tpu.memory_space<vmem>>, vector<1x128xf32>
    %4 = arith.addf %2, %3 : vector<1x128xf32>
    %c0_5 = arith.constant 0 : index
    %c0_6 = arith.constant 0 : index
    %5 = vector.load %arg3[%c0_5, %c0_6] : memref<1x128xf32, #tpu.memory_space<vmem>>, vector<1x128xf32>
    tpu.vector_store %arg3[%c0_5, %c0_6], %4 {strides = array<i32>} : memref<1x128xf32, #tpu.memory_space<vmem>>, vector<1x128xf32>,
    return
  }
}

</mosaic_0001>

<llo_original>
// kernel: tpu_custom_call.1
$region0: #{tpu_custom_call.1}
  #allocation0 [shape = 'u32[]', space=smem, size = 0x4, offset = 0x4, fixed_abs, tag = 'smem constant byte address 0x4 - core index']
  #allocation1 [shape = 'u32[144,128]{1,0:T(1,128)}', space=vmem, size = 0x12000, scoped, tag = 'internal scratch']
  %s0 = inlined_call_operand.hbm [shape: f32[1,128], index: 0, kind: input, shape index: {}]
  %s1 = inlined_call_operand.hbm [shape: f32[128,128], index: 1, kind: input, shape index: {}]
  %s2 = inlined_call_operand.vmem [shape: f32[1,128], index: 2, kind: input, shape index: {}]
  %s3 = inlined_call_operand.hbm [shape: f32[1,128], index: 3, kind: output, shape index: {}]
  %s4 = sld [smem:[#allocation0]]
  $region30: #{tpu_custom_call.1} parent=0
    _
  %s6 = ssub.s32 1, %s4
  %s7 = scalar_select 0, %s6, %s4
  $region1: #{tpu_custom_call.1} parent=0
    #allocation2 [shape = 'u8[512]{0}', space=vmem, size = 0x400, scoped, tag = 'input window, operand 0, single buffered']
    #allocation3 [shape = 's32[1]{0}', space=sflag, size = 0x4, scoped, tag = 'scoped memory for tpu_custom_call.1']
    #allocation4 [shape = 's32[1]{0}', space=sflag, size = 0x4, scoped, tag = 'scoped memory for tpu_custom_call.1']
    #allocation5 [shape = 'u8[65536]{0}', space=vmem, size = 0x10000, scoped, tag = 'input window, operand 1, single buffered']
    #allocation6 [shape = 's32[1]{0}', space=sflag, size = 0x4, scoped, tag = 'scoped memory for tpu_custom_call.1']
    #allocation7 [shape = 'u8[512]{0}', space=vmem, size = 0x400, scoped, tag = 'output window, operand 0, single buffered']
    %8 = vsyncpa [#allocation3], 0
    %9 = vsyncpa [#allocation6], 0
    %10 = vsyncpa [#allocation4], 0
    // Predicated region
    $region2: #{tpu_custom_call.1} parent=1 // pred_check
      _
    $region3: #{tpu_custom_call.1} parent=1 // pred_check_branch
      %12 = sbr.rel (0) target = $region5
    $region4: #{tpu_custom_call.1} parent=1 // pred_region
      %s14 = ssub.s32 16, 16
      %15 = vsyncadd [#allocation3], %s14
      %s17 = sshll.u32 [#allocation2], 4
      %s18 = int_to_ptr.vmem [resolvable:$true] %s17
      %20 = dma.hbm_to_vmem [thread:$0]  %s0, 16, %s18, [#allocation3]
    $region5: #{tpu_custom_call.1} parent=1 // pred_fallthru
      _
    // Predicated region
    $region6: #{tpu_custom_call.1} parent=1 // pred_check
      _
    $region7: #{tpu_custom_call.1} parent=1 // pred_check_branch
      %22 = sbr.rel (0) target = $region9
    $region8: #{tpu_custom_call.1} parent=1 // pred_region
      %s24 = ssub.s32 2048, 2048
      %25 = vsyncadd [#allocation6], %s24
      %s26 = sshll.u32 [#allocation5], 4
      %s27 = int_to_ptr.vmem [resolvable:$true] %s26
      %32 = dma.hbm_to_vmem [thread:$0]  %s1, 2048, %s27, [#allocation6], 128, 128, 8
    $region9: #{tpu_custom_call.1} parent=1 // pred_fallthru
      _
    // Predicated region
    $region10: #{tpu_custom_call.1} parent=1 // pred_check
      _
    $region11: #{tpu_custom_call.1} parent=1 // pred_check_branch
      %34 = sbr.rel (0) target = $region13
    $region12: #{tpu_custom_call.1} parent=1 // pred_region
      _
    $region13: #{tpu_custom_call.1} parent=1 // pred_fallthru
      _
    // Predicated region
    $region14: #{tpu_custom_call.1} parent=1 // pred_check
      _
    $region15: #{tpu_custom_call.1} parent=1 // pred_check_branch
      %36 = sbr.rel (0) target = $region17
    $region16: #{tpu_custom_call.1} parent=1 // pred_region
      %37 = dma.done [#allocation3], 16
    $region17: #{tpu_custom_call.1} parent=1 // pred_fallthru
      _
    // Predicated region
    $region18: #{tpu_custom_call.1} parent=1 // pred_check
      _
    $region19: #{tpu_custom_call.1} parent=1 // pred_check_branch
      %39 = sbr.rel (0) target = $region21
    $region20: #{tpu_custom_call.1} parent=1 // pred_region
      %40 = dma.done [#allocation6], 2048
    $region21: #{tpu_custom_call.1} parent=1 // pred_fallthru
      _
    %v41 = vld [vmem:[#allocation2] sm:$0x1]
    %v42 = vld [vmem:[#allocation5] sm:$0xff]
    %v43 = vld [vmem:[#allocation5 + $0x8] sm:$0xff]
    %v44 = vld [vmem:[#allocation5 + $0x10] sm:$0xff]
    %v45 = vld [vmem:[#allocation5 + $0x18] sm:$0xff]
    %v46 = vld [vmem:[#allocation5 + $0x20] sm:$0xff]
    %v47 = vld [vmem:[#allocation5 + $0x28] sm:$0xff]
    %v48 = vld [vmem:[#allocation5 + $0x30] sm:$0xff]
    %v49 = vld [vmem:[#allocation5 + $0x38] sm:$0xff]
    %v50 = vld [vmem:[#allocation5 + $0x40] sm:$0xff]
    %v51 = vld [vmem:[#allocation5 + $0x48] sm:$0xff]
    %v52 = vld [vmem:[#allocation5 + $0x50] sm:$0xff]
    %v53 = vld [vmem:[#allocation5 + $0x58] sm:$0xff]
    %v54 = vld [vmem:[#allocation5 + $0x60] sm:$0xff]
    %v55 = vld [vmem:[#allocation5 + $0x68] sm:$0xff]
    %v56 = vld [vmem:[#allocation5 + $0x70] sm:$0xff]
    %v57 = vld [vmem:[#allocation5 + $0x78] sm:$0xff]
    %v58 = vld [vmem:[%s2] sm:$0x1]
    %59 = vmatprep.subr.mxu0 0.0
    %60 = vmatpush1.xpose.msra.mxu0 %v57
    %61 = vmatprep.subr.mxu0 0.0
    %62 = vmatpush1.xpose.msra.mxu0 %v56
    %63 = vmatprep.subr.mxu0 0.0
    %64 = vmatpush1.xpose.msra.mxu0 %v55
    %65 = vmatprep.subr.mxu0 0.0
    %66 = vmatpush1.xpose.msra.mxu0 %v54
    %67 = vmatprep.subr.mxu0 0.0
    %68 = vmatpush1.xpose.msra.mxu0 %v53
    %69 = vmatprep.subr.mxu0 0.0
    %70 = vmatpush1.xpose.msra.mxu0 %v52
    %71 = vmatprep.subr.mxu0 0.0
    %72 = vmatpush1.xpose.msra.mxu0 %v51
    %73 = vmatprep.subr.mxu0 0.0
    %74 = vmatpush1.xpose.msra.mxu0 %v50
    %75 = vmatprep.subr.mxu0 0.0
    %76 = vmatpush1.xpose.msra.mxu0 %v49
    %77 = vmatprep.subr.mxu0 0.0
    %78 = vmatpush1.xpose.msra.mxu0 %v48
    %79 = vmatprep.subr.mxu0 0.0
    %80 = vmatpush1.xpose.msra.mxu0 %v47
    %81 = vmatprep.subr.mxu0 0.0
    %82 = vmatpush1.xpose.msra.mxu0 %v46
    %83 = vmatprep.subr.mxu0 0.0
    %84 = vmatpush1.xpose.msra.mxu0 %v45
    %85 = vmatprep.subr.mxu0 0.0
    %86 = vmatpush1.xpose.msra.mxu0 %v44
    %87 = vmatprep.subr.mxu0 0.0
    %88 = vmatpush1.xpose.msra.mxu0 %v43
    %89 = vmatprep.subr.mxu0 0.0
    %90 = vmatpush1.xpose.msra.mxu0 %v42
    %91 = vmatprep.subr.mxu0 0.0
    %92 = vmatpush2.xpose.msra.mxu0 0.0
    %93 = vmatprep.subr.mxu0 0.0
    %94 = vmatpush2.xpose.msra.mxu0 0.0
    %95 = vmatprep.subr.mxu0 0.0
    %96 = vmatpush2.xpose.msra.mxu0 0.0
    %97 = vmatprep.subr.mxu0 0.0
    %98 = vmatpush2.xpose.msra.mxu0 0.0
    %99 = vmatprep.subr.mxu0 0.0
    %100 = vmatpush2.xpose.msra.mxu0 0.0
    %101 = vmatprep.subr.mxu0 0.0
    %102 = vmatpush2.xpose.msra.mxu0 0.0
    %103 = vmatprep.subr.mxu0 0.0
    %104 = vmatpush2.xpose.msra.mxu0 0.0
    %105 = vmatprep.subr.mxu0 0.0
    %106 = vmatpush2.xpose.msra.mxu0 0.0
    %107 = vmatprep.subr.mxu0 0.0
    %108 = vmatpush2.xpose.msra.mxu0 0.0
    %109 = vmatprep.subr.mxu0 0.0
    %110 = vmatpush2.xpose.msra.mxu0 0.0
    %111 = vmatprep.subr.mxu0 0.0
    %112 = vmatpush2.xpose.msra.mxu0 0.0
    %113 = vmatprep.subr.mxu0 0.0
    %114 = vmatpush2.xpose.msra.mxu0 0.0
    %115 = vmatprep.subr.mxu0 0.0
    %116 = vmatpush2.xpose.msra.mxu0 0.0
    %117 = vmatprep.subr.mxu0 0.0
    %118 = vmatpush2.xpose.msra.mxu0 0.0
    %119 = vmatprep.subr.mxu0 0.0
    %120 = vmatpush2.xpose.msra.mxu0 0.0
    %121 = vmatprep.subr.mxu0 0.0
    %122 = vmatpush2.xpose.msra.mxu0 0.0
    %123 = vmatprep.mubr.f32.mxu0 0.0
    %124 = vmatmul.mubr.f32.gmra.mxu0 %v41
    %v125 = vpop.f32.mrf.mxu0
    %v126 = vadd.f32 %v58, %v125
    %v127 = vpop.f32.mrf.mxu0
    %128 = vdwg.mxu0
    %129 = vst [vmem:[#allocation7] sm:$0x1] %v126
    // Predicated region
    $region22: #{tpu_custom_call.1} parent=1 // pred_check
      _
    $region23: #{tpu_custom_call.1} parent=1 // pred_check_branch
      %131 = sbr.rel (0) target = $region25
    $region24: #{tpu_custom_call.1} parent=1 // pred_region
      %s133 = ssub.s32 16, 16
      %134 = vsyncadd [#allocation4], %s133
      %s136 = sshll.u32 [#allocation7], 4
      %s137 = int_to_ptr.vmem [resolvable:$true] %s136
      %139 = dma.vmem_to_hbm [thread:$0]  %s137, 16, %s3, [#allocation4]
    $region25: #{tpu_custom_call.1} parent=1 // pred_fallthru
      _
    // Predicated region
    $region26: #{tpu_custom_call.1} parent=1 // pred_check
      _
    $region27: #{tpu_custom_call.1} parent=1 // pred_check_branch
      %141 = sbr.rel (0) target = $region29
    $region28: #{tpu_custom_call.1} parent=1 // pred_region
      %142 = dma.done [#allocation4], 16
    $region29: #{tpu_custom_call.1} parent=1 // pred_fallthru
      _
    %143 = vsyncpa [#allocation3], 1
    %144 = vsyncpa [#allocation6], 1
    %145 = vsyncpa [#allocation4], 1

</llo_original>
